<compile_context>
chip_gen: v7x
topology: tpu7x:2x2x1
jax: 0.10.0
libtpu: 0.0.40
codegen_flags: <defaults>
</compile_context>

<pallas_src>
import functools

import jax
import jax.numpy as jnp
from jax.experimental import pallas as pl
from jax.experimental.pallas import tpu as pltpu

VOCAB_SIZE = 8
EMBED_DIM = 16
SEQ_LEN = 4

LANE = 128     # TPU lane width    -> lane-dense padded vocab dim
SUBLANE = 8    # TPU sublane width -> padded sequence rows


def _round_up(x, m):
    return (x + m - 1) // m * m


# ---------------------------------------------------------------------------
# Fused forward kernel:
#   onehot[i, v] = (v == ids[i])            (vectorized iota compares, OR-tree)
#   h            = onehot @ emb             ((S_pad, D)  MXU)
#   logits_pad   = h @ w_pad.T + b_pad      ((S_pad, V_pad) MXU, lane-dense)
# ids live in SMEM via scalar prefetch; all other operands are tiny VMEM tiles.
# ---------------------------------------------------------------------------
def fused_kernel(ids_ref, emb_ref, wt_ref, b_ref, out_ref, *,
                 seq_len, s_pad, vocab_size):
    row = jax.lax.broadcasted_iota(jnp.int32, (s_pad, vocab_size), 0)
    col = jax.lax.broadcasted_iota(jnp.int32, (s_pad, vocab_size), 1)

    # Independent per-token hit masks; combine with a balanced OR tree so the
    # scheduler sees no carried dependence chain.
    hits = [(row == i) & (col == ids_ref[i]) for i in range(seq_len)]
    while len(hits) > 1:
        nxt = [a | b for a, b in zip(hits[0::2], hits[1::2])]
        if len(hits) % 2:
            nxt.append(hits[-1])
        hits = nxt
    onehot = hits[0].astype(jnp.float32)                       # (S_pad, V)

    h = jnp.dot(onehot, emb_ref[...],
                preferred_element_type=jnp.float32)             # (S_pad, D)
    out_ref[...] = (
        jnp.dot(h, wt_ref[...], preferred_element_type=jnp.float32)
        + b_ref[...]
    )                                                           # (S_pad, V_pad)


@jax.jit
def tiny_transformer(tokens, emb, w, b):
    """tokens: int32 (S,), emb: (V, D), w: (V, D), b: (V,) -> logits (S, V)."""
    seq_len = tokens.shape[0]
    vocab_size, embed_dim = emb.shape
    v_pad = max(_round_up(vocab_size, LANE), LANE)      # 128
    s_pad = max(_round_up(seq_len, SUBLANE), SUBLANE)   # 8

    # One-time layout plumbing (fused by XLA around the single custom call):
    # pre-transpose + zero-pad w to (D, V_pad) and b to (1, V_pad).
    wt_pad = (
        jnp.zeros((embed_dim, v_pad), jnp.float32)
        .at[:, :vocab_size].set(w.astype(jnp.float32).T)
    )
    b_pad = (
        jnp.zeros((1, v_pad), jnp.float32)
        .at[:, :vocab_size].set(b.astype(jnp.float32)[None, :])
    )

    kernel = functools.partial(
        fused_kernel, seq_len=seq_len, s_pad=s_pad, vocab_size=vocab_size
    )
    out_pad = pl.pallas_call(
        kernel,
        out_shape=jax.ShapeDtypeStruct((s_pad, v_pad), jnp.float32),
        grid_spec=pltpu.PrefetchScalarGridSpec(
            num_scalar_prefetch=1,          # raw (S,) ids -> SMEM
            grid=(1,),
            in_specs=[
                pl.BlockSpec((vocab_size, embed_dim), lambda i, ids: (0, 0)),
                pl.BlockSpec((embed_dim, v_pad), lambda i, ids: (0, 0)),
                pl.BlockSpec((1, v_pad), lambda i, ids: (0, 0)),
            ],
            out_specs=pl.BlockSpec((s_pad, v_pad), lambda i, ids: (0, 0)),
        ),
        compiler_params=pltpu.CompilerParams(
            dimension_semantics=("arbitrary",)   # single step; nothing to shard
        ),
    )(tokens.astype(jnp.int32), emb.astype(jnp.float32), wt_pad, b_pad)

    # Padded rows carry only the bias (onehot rows >= seq_len are zero);
    # padded vocab lanes are zero.  Both are sliced off here.
    return out_pad[:seq_len, :vocab_size]


if __name__ == "__main__":
    key = jax.random.PRNGKey(0)
    k_tok, k_emb, k_w, k_b = jax.random.split(key, 4)

    # Deterministic "parameters" (shapes from the module __init__).
    emb = jax.random.normal(k_emb, (VOCAB_SIZE, EMBED_DIM), dtype=jnp.float32)
    w = jax.random.normal(k_w, (VOCAB_SIZE, EMBED_DIM), dtype=jnp.float32) * 0.1
    b = jax.random.normal(k_b, (VOCAB_SIZE,), dtype=jnp.float32) * 0.1

    # Input tokens, like torch.randint(0, vocab_size, (4,)).
    tokens = jax.random.randint(k_tok, (SEQ_LEN,), 0, VOCAB_SIZE, dtype=jnp.int32)

    logits = tiny_transformer(tokens, emb, w, b)
    jax.block_until_ready(logits)

    # Pure-JAX reference check (embedding lookup -> linear).
    ref = emb[tokens] @ w.T + b
    assert logits.shape == (SEQ_LEN, VOCAB_SIZE)
    assert jnp.allclose(logits, ref, atol=1e-4, rtol=1e-4), "mismatch vs reference"

    print("KERNEL_OK")
</pallas_src>

<mosaic_0001>
module attributes {stable_mosaic.version = 11 : i64} {
  func.func @fused_kernel(%arg0: i32, %arg1: memref<4xi32, #tpu.memory_space<smem>>, %arg2: memref<8x16xf32, #tpu.memory_space<vmem>>, %arg3: memref<16x128xf32, #tpu.memory_space<vmem>>, %arg4: memref<1x128xf32, #tpu.memory_space<vmem>>, %arg5: memref<8x128xf32, #tpu.memory_space<vmem>>) attributes {dimension_semantics = [#tpu.dimension_semantics<arbitrary>], iteration_bounds = array<i64: 1>, scalar_prefetch = 1 : i64, scratch_operands = 0 : i64, tpu.core_type = #tpu.core_type<tc>, window_params = [{pipeline_mode = #tpu.pipeline_mode<synchronous>, transform_indices = @transform_0, window_bounds = array<i64: 8, 16>}, {pipeline_mode = #tpu.pipeline_mode<synchronous>, transform_indices = @transform_1, window_bounds = array<i64: 16, 128>}, {pipeline_mode = #tpu.pipeline_mode<synchronous>, transform_indices = @transform_2, window_bounds = array<i64: 1, 128>}, {pipeline_mode = #tpu.pipeline_mode<synchronous>, transform_indices = @transform_3, window_bounds = array<i64: 8, 128>}]} {
    %0 = tpu.iota {dimensions = array<i32: 0>} : vector<8x8xi32>
    %1 = tpu.iota {dimensions = array<i32: 1>} : vector<8x8xi32>
    %c0_i32 = arith.constant 0 : i32
    %2 = vector.broadcast %c0_i32 : i32 to vector<8x8xi32>
    %3 = arith.cmpi eq, %0, %2 : vector<8x8xi32>
    %c0 = arith.constant 0 : index
    %4 = memref.load %arg1[%c0] : memref<4xi32, #tpu.memory_space<smem>>
    %5 = vector.broadcast %4 : i32 to vector<8x8xi32>
    %6 = arith.cmpi eq, %1, %5 : vector<8x8xi32>
    %7 = arith.andi %3, %6 : vector<8x8xi1>
    %c1_i32 = arith.constant 1 : i32
    %8 = vector.broadcast %c1_i32 : i32 to vector<8x8xi32>
    %9 = arith.cmpi eq, %0, %8 : vector<8x8xi32>
    %c1 = arith.constant 1 : index
    %10 = memref.load %arg1[%c1] : memref<4xi32, #tpu.memory_space<smem>>
    %11 = vector.broadcast %10 : i32 to vector<8x8xi32>
    %12 = arith.cmpi eq, %1, %11 : vector<8x8xi32>
    %13 = arith.andi %9, %12 : vector<8x8xi1>
    %c2_i32 = arith.constant 2 : i32
    %14 = vector.broadcast %c2_i32 : i32 to vector<8x8xi32>
    %15 = arith.cmpi eq, %0, %14 : vector<8x8xi32>
    %c2 = arith.constant 2 : index
    %16 = memref.load %arg1[%c2] : memref<4xi32, #tpu.memory_space<smem>>
    %17 = vector.broadcast %16 : i32 to vector<8x8xi32>
    %18 = arith.cmpi eq, %1, %17 : vector<8x8xi32>
    %19 = arith.andi %15, %18 : vector<8x8xi1>
    %c3_i32 = arith.constant 3 : i32
    %20 = vector.broadcast %c3_i32 : i32 to vector<8x8xi32>
    %21 = arith.cmpi eq, %0, %20 : vector<8x8xi32>
    %c3 = arith.constant 3 : index
    %22 = memref.load %arg1[%c3] : memref<4xi32, #tpu.memory_space<smem>>
    %23 = vector.broadcast %22 : i32 to vector<8x8xi32>
    %24 = arith.cmpi eq, %1, %23 : vector<8x8xi32>
    %25 = arith.andi %21, %24 : vector<8x8xi1>
    %26 = arith.ori %7, %13 : vector<8x8xi1>
    %27 = arith.ori %19, %25 : vector<8x8xi1>
    %28 = arith.ori %26, %27 : vector<8x8xi1>
    %29 = arith.extui %28 : vector<8x8xi1> to vector<8x8xi32>
    %30 = arith.sitofp %29 : vector<8x8xi32> to vector<8x8xf32>
    %c0_0 = arith.constant 0 : index
    %c0_1 = arith.constant 0 : index
    %31 = vector.load %arg2[%c0_0, %c0_1] : memref<8x16xf32, #tpu.memory_space<vmem>>, vector<8x16xf32>
    %cst = arith.constant dense<0.000000e+00> : vector<8x16xf32>
    %32 = tpu.matmul %30, %31, %cst {dimension_numbers = #tpu.dot_dimension_numbers<[1], [0], [0], [1], [0, 0, 1, 1], [], []>} : vector<8x8xf32>, vector<8x16xf32>, vector<8x16xf32> -> vector<8x16xf32>
    %c0_2 = arith.constant 0 : index
    %c0_3 = arith.constant 0 : index
    %33 = vector.load %arg3[%c0_2, %c0_3] : memref<16x128xf32, #tpu.memory_space<vmem>>, vector<16x128xf32>
    %cst_4 = arith.constant dense<0.000000e+00> : vector<8x128xf32>
    %34 = tpu.matmul %32, %33, %cst_4 {dimension_numbers = #tpu.dot_dimension_numbers<[1], [0], [0], [1], [0, 0, 1, 1], [], []>} : vector<8x16xf32>, vector<16x128xf32>, vector<8x128xf32> -> vector<8x128xf32>
    %c0_5 = arith.constant 0 : index
    %c0_6 = arith.constant 0 : index
    %35 = vector.load %arg4[%c0_5, %c0_6] : memref<1x128xf32, #tpu.memory_space<vmem>>, vector<1x128xf32>
    %36 = vector.broadcast %35 : vector<1x128xf32> to vector<8x128xf32>
    %37 = arith.addf %34, %36 : vector<8x128xf32>
    %c0_7 = arith.constant 0 : index
    %c0_8 = arith.constant 0 : index
    %38 = vector.load %arg5[%c0_7, %c0_8] : memref<8x128xf32, #tpu.memory_space<vmem>>, vector<8x128xf32>
    tpu.vector_store %arg5[%c0_7, %c0_8], %37 {strides = array<i32>} : memref<8x128xf32, #tpu.memory_space<vmem>>, vector<8x128xf32>,
    return
  }
  func.func @transform_0(%arg0: i32, %arg1: memref<4xi32, #tpu.memory_space<smem>>) -> (i32, i32) {
    %c0_i32 = arith.constant 0 : i32
    %c0_i32_0 = arith.constant 0 : i32
    %c0_i32_1 = arith.constant 0 : i32
    return %c0_i32, %c0_i32_0 : i32, i32
  }
  func.func @transform_1(%arg0: i32, %arg1: memref<4xi32, #tpu.memory_space<smem>>) -> (i32, i32) {
    %c0_i32 = arith.constant 0 : i32
    %c0_i32_0 = arith.constant 0 : i32
    %c0_i32_1 = arith.constant 0 : i32
    return %c0_i32, %c0_i32_0 : i32, i32
  }
  func.func @transform_2(%arg0: i32, %arg1: memref<4xi32, #tpu.memory_space<smem>>) -> (i32, i32) {
    %c0_i32 = arith.constant 0 : i32
    %c0_i32_0 = arith.constant 0 : i32
    %c0_i32_1 = arith.constant 0 : i32
    return %c0_i32, %c0_i32_0 : i32, i32
  }
  func.func @transform_3(%arg0: i32, %arg1: memref<4xi32, #tpu.memory_space<smem>>) -> (i32, i32) {
    %c0_i32 = arith.constant 0 : i32
    %c0_i32_0 = arith.constant 0 : i32
    %c0_i32_1 = arith.constant 0 : i32
    return %c0_i32, %c0_i32_0 : i32, i32
  }
}

</mosaic_0001>

<llo_original>
// kernel: tiny_transformer.1
$region0: #{tiny_transformer.1}
  #allocation0 [shape = 'u32[]', space=smem, size = 0x4, offset = 0x4, fixed_abs, tag = 'smem constant byte address 0x4 - core index']
  #allocation1 [shape = 'u32[144,128]{1,0:T(1,128)}', space=vmem, size = 0x12000, scoped, tag = 'internal scratch']
  #allocation2 [shape = 's32[1]{0}', space=sflag, size = 0x4, scoped, tag = 'scoped memory for tiny_transformer.1']
  #allocation3 [shape = 'u8[512]{0}', space=smem, size = 0x200, scoped, tag = 'prefetched SMEM operand 0']
  %s0 = inlined_call_operand.vmem [shape: s32[4], index: 0, kind: input, shape index: {}]
  %s1 = inlined_call_operand.vmem [shape: f32[8,16], index: 1, kind: input, shape index: {}]
  %s2 = inlined_call_operand.vmem [shape: f32[16,128], index: 2, kind: input, shape index: {}]
  %s3 = inlined_call_operand.vmem [shape: f32[1,128], index: 3, kind: input, shape index: {}]
  %s4 = inlined_call_operand.vmem [shape: f32[8,128], index: 4, kind: output, shape index: {}]
  %s5 = sld [smem:[#allocation0]]
  $region22: #{tiny_transformer.1} parent=0
    _
  %s7 = ssub.s32 1, %s5
  %s8 = scalar_select 0, %s7, %s5
  %s9 = sshll.u32 %s0, 4
  %s10 = int_to_ptr.vmem [resolvable:$true] %s9
  %12 = dma.vmem_to_smem %s10, 16, [#allocation3], [#allocation2]
  %13 = dma.done [#allocation2], 16
  %14 = sfence
  // Predicated region
  $region2: #{tiny_transformer.1} parent=0 // pred_check
    _
  $region3: #{tiny_transformer.1} parent=0 // pred_check_branch
    %16 = sbr.rel (0) target = $region5
  $region4: #{tiny_transformer.1} parent=0 // pred_region
    _
  $region5: #{tiny_transformer.1} parent=0 // pred_fallthru
    _
  // Predicated region
  $region6: #{tiny_transformer.1} parent=0 // pred_check
    _
  $region7: #{tiny_transformer.1} parent=0 // pred_check_branch
    %18 = sbr.rel (0) target = $region9
  $region8: #{tiny_transformer.1} parent=0 // pred_region
    _
  $region9: #{tiny_transformer.1} parent=0 // pred_fallthru
    _
  // Predicated region
  $region10: #{tiny_transformer.1} parent=0 // pred_check
    _
  $region11: #{tiny_transformer.1} parent=0 // pred_check_branch
    %20 = sbr.rel (0) target = $region13
  $region12: #{tiny_transformer.1} parent=0 // pred_region
    _
  $region13: #{tiny_transformer.1} parent=0 // pred_fallthru
    _
  %v21 = vlaneseq
  %v22 = vshrl.u32 %v21, 7
  %v23 = vlaneseq
  %v24 = vand.u32 %v23, 127
  %vm25 = vcmp.eq.s32.totalorder %v22, 0
  %s26 = sld [smem:[#allocation3]]
  %v27 = vstv %s26
  %vm28 = vcmp.eq.s32.totalorder %v24, %v27
  %vm29 = vmand %vm25, %vm28
  %vm30 = vcmp.eq.s32.totalorder %v22, 1
  %s31 = sld [smem:[#allocation3 + $0x1]]
  %v32 = vstv %s31
  %vm33 = vcmp.eq.s32.totalorder %v24, %v32
  %vm34 = vmand %vm30, %vm33
  %vm35 = vcmp.eq.s32.totalorder %v22, 2
  %s36 = sld [smem:[#allocation3 + $0x2]]
  %v37 = vstv %s36
  %vm38 = vcmp.eq.s32.totalorder %v24, %v37
  %vm39 = vmand %vm35, %vm38
  %vm40 = vcmp.eq.s32.totalorder %v22, 3
  %s41 = sld [smem:[#allocation3 + $0x3]]
  %v42 = vstv %s41
  %vm43 = vcmp.eq.s32.totalorder %v24, %v42
  %vm44 = vmand %vm40, %vm43
  %vm45 = vmor %vm29, %vm34
  %vm46 = vmor %vm39, %vm44
  %vm47 = vmor %vm45, %vm46
  %v48 = vsel %vm47, 1, 0
  %v49 = vcvt.s32.f32 %v48
  %v50 = vld [vmem:[%s1] sm:$0xff]
  %vm51 = vcmask 64512
  %v53 = vsel %vm51, %v49, 0
  %55 = vmatprep.subr.mxu0 0.0
  %56 = vmatpush1.msra.mxu0 %v50
  %57 = vmatprep.subr.mxu0 0.0
  %58 = vmatpush1.msra.mxu0 0.0
  %59 = vmatprep.subr.mxu0 0.0
  %60 = vmatpush1.msra.mxu0 0.0
  %61 = vmatprep.subr.mxu0 0.0
  %62 = vmatpush1.msra.mxu0 0.0
  %63 = vmatprep.subr.mxu0 0.0
  %64 = vmatpush1.msra.mxu0 0.0
  %65 = vmatprep.subr.mxu0 0.0
  %66 = vmatpush1.msra.mxu0 0.0
  %67 = vmatprep.subr.mxu0 0.0
  %68 = vmatpush1.msra.mxu0 0.0
  %69 = vmatprep.subr.mxu0 0.0
  %70 = vmatpush1.msra.mxu0 0.0
  %71 = vmatprep.subr.mxu0 0.0
  %72 = vmatpush1.msra.mxu0 0.0
  %73 = vmatprep.subr.mxu0 0.0
  %74 = vmatpush1.msra.mxu0 0.0
  %75 = vmatprep.subr.mxu0 0.0
  %76 = vmatpush1.msra.mxu0 0.0
  %77 = vmatprep.subr.mxu0 0.0
  %78 = vmatpush1.msra.mxu0 0.0
  %79 = vmatprep.subr.mxu0 0.0
  %80 = vmatpush1.msra.mxu0 0.0
  %81 = vmatprep.subr.mxu0 0.0
  %82 = vmatpush1.msra.mxu0 0.0
  %83 = vmatprep.subr.mxu0 0.0
  %84 = vmatpush1.msra.mxu0 0.0
  %85 = vmatprep.subr.mxu0 0.0
  %86 = vmatpush1.msra.mxu0 0.0
  %87 = vmatprep.subr.mxu0 0.0
  %88 = vmatpush1.msra.mxu0 0.0
  %89 = vmatprep.subr.mxu0 0.0
  %90 = vmatpush1.msra.mxu0 0.0
  %91 = vmatprep.subr.mxu0 0.0
  %92 = vmatpush1.msra.mxu0 0.0
  %93 = vmatprep.subr.mxu0 0.0
  %94 = vmatpush1.msra.mxu0 0.0
  %95 = vmatprep.subr.mxu0 0.0
  %96 = vmatpush1.msra.mxu0 0.0
  %97 = vmatprep.subr.mxu0 0.0
  %98 = vmatpush1.msra.mxu0 0.0
  %99 = vmatprep.subr.mxu0 0.0
  %100 = vmatpush1.msra.mxu0 0.0
  %101 = vmatprep.subr.mxu0 0.0
  %102 = vmatpush1.msra.mxu0 0.0
  %103 = vmatprep.subr.mxu0 0.0
  %104 = vmatpush1.msra.mxu0 0.0
  %105 = vmatprep.subr.mxu0 0.0
  %106 = vmatpush1.msra.mxu0 0.0
  %107 = vmatprep.subr.mxu0 0.0
  %108 = vmatpush1.msra.mxu0 0.0
  %109 = vmatprep.subr.mxu0 0.0
  %110 = vmatpush1.msra.mxu0 0.0
  %111 = vmatprep.subr.mxu0 0.0
  %112 = vmatpush1.msra.mxu0 0.0
  %113 = vmatprep.subr.mxu0 0.0
  %114 = vmatpush1.msra.mxu0 0.0
  %115 = vmatprep.subr.mxu0 0.0
  %116 = vmatpush1.msra.mxu0 0.0
  %117 = vmatprep.subr.mxu0 0.0
  %118 = vmatpush1.msra.mxu0 0.0
  %119 = vmatprep.mubr.f32.mxu0 0.0
  %120 = vmatmul.mubr.f32.gmra.mrb[0].mxu0 %v53
  %v121 = vpop.f32.mrb[0].mxu0
  %v122 = vadd.f32 0.0, %v121
  %v123 = vpop.f32.mrb[0].mxu0
  %124 = vdwg.mxu0
  %v125 = vld [vmem:[%s2] sm:$0xff]
  %v126 = vld [vmem:[%s2 + $0x8] sm:$0xff]
  %v127 = vld [vmem:[%s3] sm:$0x1]
  %v129 = vlaneseq
  %v130 = vshrl.u32 %v129, 7
  %v131 = vsub.s32 0, %v130
  %v132 = vrot.slane %v127, %v131
  %vm134 = vcmask 130048
  %v136 = vsel %vm134, %v122, 0
  %138 = vmatprep.subr.mxu0 0.0
  %139 = vmatpush1.msra.mxu0 %v125
  %140 = vmatprep.subr.mxu0 0.0
  %141 = vmatpush1.msra.mxu0 %v126
  %142 = vmatprep.subr.mxu0 0.0
  %143 = vmatpush1.msra.mxu0 0.0
  %144 = vmatprep.subr.mxu0 0.0
  %145 = vmatpush1.msra.mxu0 0.0
  %146 = vmatprep.subr.mxu0 0.0
  %147 = vmatpush1.msra.mxu0 0.0
  %148 = vmatprep.subr.mxu0 0.0
  %149 = vmatpush1.msra.mxu0 0.0
  %150 = vmatprep.subr.mxu0 0.0
  %151 = vmatpush1.msra.mxu0 0.0
  %152 = vmatprep.subr.mxu0 0.0
  %153 = vmatpush1.msra.mxu0 0.0
  %154 = vmatprep.subr.mxu0 0.0
  %155 = vmatpush1.msra.mxu0 0.0
  %156 = vmatprep.subr.mxu0 0.0
  %157 = vmatpush1.msra.mxu0 0.0
  %158 = vmatprep.subr.mxu0 0.0
  %159 = vmatpush1.msra.mxu0 0.0
  %160 = vmatprep.subr.mxu0 0.0
  %161 = vmatpush1.msra.mxu0 0.0
  %162 = vmatprep.subr.mxu0 0.0
  %163 = vmatpush1.msra.mxu0 0.0
  %164 = vmatprep.subr.mxu0 0.0
  %165 = vmatpush1.msra.mxu0 0.0
  %166 = vmatprep.subr.mxu0 0.0
  %167 = vmatpush1.msra.mxu0 0.0
  %168 = vmatprep.subr.mxu0 0.0
  %169 = vmatpush1.msra.mxu0 0.0
  %170 = vmatprep.subr.mxu0 0.0
  %171 = vmatpush1.msra.mxu0 0.0
  %172 = vmatprep.subr.mxu0 0.0
  %173 = vmatpush1.msra.mxu0 0.0
  %174 = vmatprep.subr.mxu0 0.0
  %175 = vmatpush1.msra.mxu0 0.0
  %176 = vmatprep.subr.mxu0 0.0
  %177 = vmatpush1.msra.mxu0 0.0
  %178 = vmatprep.subr.mxu0 0.0
  %179 = vmatpush1.msra.mxu0 0.0
  %180 = vmatprep.subr.mxu0 0.0
  %181 = vmatpush1.msra.mxu0 0.0
  %182 = vmatprep.subr.mxu0 0.0
  %183 = vmatpush1.msra.mxu0 0.0
  %184 = vmatprep.subr.mxu0 0.0
  %185 = vmatpush1.msra.mxu0 0.0
  %186 = vmatprep.subr.mxu0 0.0
  %187 = vmatpush1.msra.mxu0 0.0
  %188 = vmatprep.subr.mxu0 0.0
  %189 = vmatpush1.msra.mxu0 0.0
  %190 = vmatprep.subr.mxu0 0.0
  %191 = vmatpush1.msra.mxu0 0.0
  %192 = vmatprep.subr.mxu0 0.0
  %193 = vmatpush1.msra.mxu0 0.0
  %194 = vmatprep.subr.mxu0 0.0
  %195 = vmatpush1.msra.mxu0 0.0
  %196 = vmatprep.subr.mxu0 0.0
  %197 = vmatpush1.msra.mxu0 0.0
  %198 = vmatprep.subr.mxu0 0.0
  %199 = vmatpush1.msra.mxu0 0.0
  %200 = vmatprep.subr.mxu0 0.0
  %201 = vmatpush1.msra.mxu0 0.0
  %202 = vmatprep.mubr.f32.mxu0 0.0
  %203 = vmatmul.mubr.f32.gmra.mrb[0].mxu0 %v136
  %v204 = vpop.f32.mrb[0].mxu0
  %v205 = vadd.f32 %v132, %v204
  %v206 = vpop.f32.mrb[0].mxu0
  %207 = vdwg.mxu0
  %208 = vst [vmem:[%s4] sm:$0xff] %v205
  // Predicated region
  $region14: #{tiny_transformer.1} parent=0 // pred_check
    _
  $region15: #{tiny_transformer.1} parent=0 // pred_check_branch
    %210 = sbr.rel (0) target = $region17
  $region16: #{tiny_transformer.1} parent=0 // pred_region
    _
  $region17: #{tiny_transformer.1} parent=0 // pred_fallthru
    _
  // Predicated region
  $region18: #{tiny_transformer.1} parent=0 // pred_check
    _
  $region19: #{tiny_transformer.1} parent=0 // pred_check_branch
    %212 = sbr.rel (0) target = $region21
  $region20: #{tiny_transformer.1} parent=0 // pred_region
    _
  $region21: #{tiny_transformer.1} parent=0 // pred_fallthru
    _

</llo_original>
